<compile_context>
chip_gen: v5e
topology: v5e:2x2
jax: 0.10.0
libtpu: 0.0.40
codegen_flags: <defaults>
</compile_context>

<pallas_src>
import functools

import jax
import jax.numpy as jnp
from jax import lax
from jax.experimental import pallas as pl
from jax.experimental.pallas import tpu as pltpu

_LANE = 128  # TPU vreg lane width


def _round_up(n: int, m: int) -> int:
    return ((n + m - 1) // m) * m


def _lincls_kernel(x_ref, w_ref, b_ref, o_ref):
    # x_ref: (TM, D)        batch tile
    # w_ref: (O_pad, D)     PyTorch (out, in) layout, resident across the grid
    # b_ref: (1, O_pad)     broadcasts over batch rows
    # o_ref: (TM, O_pad)    lane-dense output tile
    x = x_ref[...]
    w = w_ref[...]
    # Contract on D directly (transposed-B matmul) -> no wrapper transpose.
    acc = lax.dot_general(
        x, w,
        dimension_numbers=(((1,), (1,)), ((), ())),
        preferred_element_type=jnp.float32,
    )                                                    # (TM, O_pad), f32 acc
    o_ref[...] = (acc + b_ref[...]).astype(o_ref.dtype)


def prepare_lincls_params(weight, bias):
    """One-time parameter prep (call once at init, NOT per forward).

    weight: (O, D) in PyTorch nn.Linear layout; bias: (O,).
    Pads the output dim up to a multiple of 128 so kernel stores are
    unmasked / lane-dense.  Padded weight rows & bias entries are zero.
    """
    O, D = weight.shape
    o_pad = max(_round_up(O, _LANE), _LANE)
    w_pad = jnp.zeros((o_pad, D), dtype=weight.dtype).at[:O, :].set(weight)
    b_pad = jnp.zeros((1, o_pad), dtype=bias.dtype).at[0, :O].set(bias)
    return w_pad, b_pad


@functools.partial(jax.jit, static_argnames=("out_dim", "block_b"))
def lincls_forward(x, w_pad, b_pad, *, out_dim, block_b=256):
    """x: (B, D); w_pad: (O_pad, D); b_pad: (1, O_pad). Returns (B, out_dim)."""
    B, D = x.shape
    o_pad = w_pad.shape[0]

    # Batch tile: multiple of 8 sublanes, capped at block_b (keeps the
    # x double-buffer bounded; on v7x's 64 MiB VMEM prefer block_b<=256 for
    # very large D, or raise vmem_limit_bytes explicitly).
    tm = min(block_b, _round_up(B, 8))
    grid = (pl.cdiv(B, tm),)

    cost = pl.CostEstimate(
        flops=2 * B * D * o_pad,
        transcendentals=0,
        bytes_accessed=4 * (B * D + D * o_pad + B * o_pad),
    )

    out_pad = pl.pallas_call(
        _lincls_kernel,
        out_shape=jax.ShapeDtypeStruct((B, o_pad), x.dtype),
        grid_spec=pltpu.PrefetchScalarGridSpec(
            num_scalar_prefetch=0,
            grid=grid,
            in_specs=[
                pl.BlockSpec((tm, D), lambda i: (i, 0)),      # batch-tiled x
                pl.BlockSpec((o_pad, D), lambda i: (0, 0)),   # resident weight
                pl.BlockSpec((1, o_pad), lambda i: (0, 0)),   # resident bias
            ],
            out_specs=pl.BlockSpec((tm, o_pad), lambda i: (i, 0)),
        ),
        compiler_params=pltpu.CompilerParams(
            dimension_semantics=("parallel",),   # independent batch tiles
        ),
        cost_estimate=cost,
    )(x, w_pad, b_pad)

    # Caller-facing semantics of the PyTorch module: (B, out_dim) logits.
    return out_pad[:, :out_dim]


if __name__ == "__main__":
    # Module defaults: input_dim=512, output_dim=8. Small batch.
    B, D, O = 8, 512, 8

    key = jax.random.PRNGKey(0)
    kx, kw, kb = jax.random.split(key, 3)

    x = jax.random.normal(kx, (B, D), dtype=jnp.float32)
    # Deterministic synthetic parameter init (roughly matches nn.Linear scale).
    bound = 1.0 / (D ** 0.5)
    weight = jax.random.uniform(kw, (O, D), minval=-bound, maxval=bound,
                                dtype=jnp.float32)
    bias = jax.random.uniform(kb, (O,), minval=-bound, maxval=bound,
                              dtype=jnp.float32)

    # One-time parameter preparation (lane padding) — outside the hot path.
    w_pad, b_pad = prepare_lincls_params(weight, bias)

    out = lincls_forward(x, w_pad, b_pad, out_dim=O)
    out = jax.block_until_ready(out)

    # Reference check in plain JAX.
    ref = x @ weight.T + bias
    assert out.shape == (B, O)
    assert jnp.allclose(out, ref, atol=1e-5, rtol=1e-5)

    print("KERNEL_OK")
</pallas_src>

<mosaic_0001>
module attributes {stable_mosaic.version = 11 : i64} {
  func.func @_lincls_kernel(%arg0: i32, %arg1: memref<8x512xf32, #tpu.memory_space<vmem>>, %arg2: memref<128x512xf32, #tpu.memory_space<vmem>>, %arg3: memref<1x128xf32, #tpu.memory_space<vmem>>, %arg4: memref<8x128xf32, #tpu.memory_space<vmem>>) attributes {dimension_semantics = [#tpu.dimension_semantics<parallel>], iteration_bounds = array<i64: 1>, scalar_prefetch = 0 : i64, scratch_operands = 0 : i64, tpu.core_type = #tpu.core_type<tc>, window_params = [{transform_indices = @transform_0, window_bounds = array<i64: 8, 512>}, {pipeline_mode = #tpu.pipeline_mode<synchronous>, transform_indices = @transform_1, window_bounds = array<i64: 128, 512>}, {pipeline_mode = #tpu.pipeline_mode<synchronous>, transform_indices = @transform_2, window_bounds = array<i64: 1, 128>}, {transform_indices = @transform_3, window_bounds = array<i64: 8, 128>}]} {
    %c0 = arith.constant 0 : index
    %c0_0 = arith.constant 0 : index
    %0 = vector.load %arg1[%c0, %c0_0] : memref<8x512xf32, #tpu.memory_space<vmem>>, vector<8x512xf32>
    %c0_1 = arith.constant 0 : index
    %c0_2 = arith.constant 0 : index
    %1 = vector.load %arg2[%c0_1, %c0_2] : memref<128x512xf32, #tpu.memory_space<vmem>>, vector<128x512xf32>
    %cst = arith.constant dense<0.000000e+00> : vector<8x128xf32>
    %2 = tpu.matmul %0, %1, %cst {dimension_numbers = #tpu.dot_dimension_numbers<[1], [1], [0], [0], [0, 0, 1, 0], [], []>} : vector<8x512xf32>, vector<128x512xf32>, vector<8x128xf32> -> vector<8x128xf32>
    %c0_3 = arith.constant 0 : index
    %c0_4 = arith.constant 0 : index
    %3 = vector.load %arg3[%c0_3, %c0_4] : memref<1x128xf32, #tpu.memory_space<vmem>>, vector<1x128xf32>
    %4 = vector.broadcast %3 : vector<1x128xf32> to vector<8x128xf32>
    %5 = arith.addf %2, %4 : vector<8x128xf32>
    %c0_5 = arith.constant 0 : index
    %c0_6 = arith.constant 0 : index
    %6 = vector.load %arg4[%c0_5, %c0_6] : memref<8x128xf32, #tpu.memory_space<vmem>>, vector<8x128xf32>
    tpu.vector_store %arg4[%c0_5, %c0_6], %5 {strides = array<i32>} : memref<8x128xf32, #tpu.memory_space<vmem>>, vector<8x128xf32>,
    return
  }
  func.func @transform_0(%arg0: i32) -> (i32, i32) {
    %c0_i32 = arith.constant 0 : i32
    %c0_i32_0 = arith.constant 0 : i32
    return %arg0, %c0_i32 : i32, i32
  }
  func.func @transform_1(%arg0: i32) -> (i32, i32) {
    %c0_i32 = arith.constant 0 : i32
    %c0_i32_0 = arith.constant 0 : i32
    %c0_i32_1 = arith.constant 0 : i32
    return %c0_i32, %c0_i32_0 : i32, i32
  }
  func.func @transform_2(%arg0: i32) -> (i32, i32) {
    %c0_i32 = arith.constant 0 : i32
    %c0_i32_0 = arith.constant 0 : i32
    %c0_i32_1 = arith.constant 0 : i32
    return %c0_i32, %c0_i32_0 : i32, i32
  }
  func.func @transform_3(%arg0: i32) -> (i32, i32) {
    %c0_i32 = arith.constant 0 : i32
    %c0_i32_0 = arith.constant 0 : i32
    return %arg0, %c0_i32 : i32, i32
  }
}

</mosaic_0001>

<llo_original>
// kernel: lincls_forward.1
$region0: #{lincls_forward.1}
  #allocation0 [shape = 'u32[]', space=smem, size = 0x4, offset = 0x4, fixed_abs, tag = 'smem constant byte address 0x4 - core index']
  #allocation1 [shape = 'u32[72,128]{1,0:T(1,128)}', space=vmem, size = 0x9000, scoped, tag = 'internal scratch']
  %s0 = inlined_call_operand.hbm [shape: f32[8,512], index: 0, kind: input, shape index: {}]
  %s1 = inlined_call_operand.hbm [shape: f32[128,512], index: 1, kind: input, shape index: {}]
  %s2 = inlined_call_operand.vmem [shape: f32[1,128], index: 2, kind: input, shape index: {}]
  %s3 = inlined_call_operand.hbm [shape: f32[8,128], index: 3, kind: output, shape index: {}]
  %s4 = sld [smem:[#allocation0]]
  $region30: #{lincls_forward.1} parent=0
    _
  %s6 = ssub.s32 1, %s4
  %s7 = scalar_select 0, %s6, %s4
  $region1: #{lincls_forward.1} parent=0
    #allocation2 [shape = 'u8[16384]{0}', space=vmem, size = 0x4000, scoped, tag = 'input window, operand 0, single buffered']
    #allocation3 [shape = 's32[1]{0}', space=sflag, size = 0x4, scoped, tag = 'scoped memory for lincls_forward.1']
    #allocation4 [shape = 's32[1]{0}', space=sflag, size = 0x4, scoped, tag = 'scoped memory for lincls_forward.1']
    #allocation5 [shape = 'u8[262144]{0}', space=vmem, size = 0x40000, scoped, tag = 'input window, operand 1, single buffered']
    #allocation6 [shape = 's32[1]{0}', space=sflag, size = 0x4, scoped, tag = 'scoped memory for lincls_forward.1']
    #allocation7 [shape = 'u8[4096]{0}', space=vmem, size = 0x1000, scoped, tag = 'output window, operand 0, single buffered']
    %8 = vsyncpa [#allocation3], 0
    %9 = vsyncpa [#allocation6], 0
    %10 = vsyncpa [#allocation4], 0
    // Predicated region
    $region2: #{lincls_forward.1} parent=1 // pred_check
      _
    $region3: #{lincls_forward.1} parent=1 // pred_check_branch
      %12 = sbr.rel (0) target = $region5
    $region4: #{lincls_forward.1} parent=1 // pred_region
      %14 = vsyncadd [#allocation3], 0
      %s16 = sshll.u32 %s0, 4
      %s17 = int_to_ptr.hbm [resolvable:$true] %s16
      %s18 = sshll.u32 [#allocation2], 4
      %s19 = int_to_ptr.vmem [resolvable:$true] %s18
      %21 = dma.hbm_to_vmem [thread:$0]  %s17, 512, %s19, [#allocation3]
    $region5: #{lincls_forward.1} parent=1 // pred_fallthru
      _
    // Predicated region
    $region6: #{lincls_forward.1} parent=1 // pred_check
      _
    $region7: #{lincls_forward.1} parent=1 // pred_check_branch
      %23 = sbr.rel (0) target = $region9
    $region8: #{lincls_forward.1} parent=1 // pred_region
      %25 = vsyncadd [#allocation6], 0
      %s26 = sshll.u32 %s1, 4
      %s27 = int_to_ptr.hbm [resolvable:$true] %s26
      %s28 = sshll.u32 [#allocation5], 4
      %s29 = int_to_ptr.vmem [resolvable:$true] %s28
      %34 = dma.hbm_to_vmem [thread:$0]  %s27, 8192, %s29, [#allocation6], 512, 512, 32
    $region9: #{lincls_forward.1} parent=1 // pred_fallthru
      _
    // Predicated region
    $region10: #{lincls_forward.1} parent=1 // pred_check
      _
    $region11: #{lincls_forward.1} parent=1 // pred_check_branch
      %36 = sbr.rel (0) target = $region13
    $region12: #{lincls_forward.1} parent=1 // pred_region
      _
    $region13: #{lincls_forward.1} parent=1 // pred_fallthru
      _
    // Predicated region
    $region14: #{lincls_forward.1} parent=1 // pred_check
      _
    $region15: #{lincls_forward.1} parent=1 // pred_check_branch
      %38 = sbr.rel (0) target = $region17
    $region16: #{lincls_forward.1} parent=1 // pred_region
      %40 = dma.done [#allocation3], 512
    $region17: #{lincls_forward.1} parent=1 // pred_fallthru
      _
    // Predicated region
    $region18: #{lincls_forward.1} parent=1 // pred_check
      _
    $region19: #{lincls_forward.1} parent=1 // pred_check_branch
      %42 = sbr.rel (0) target = $region21
    $region20: #{lincls_forward.1} parent=1 // pred_region
      %44 = dma.done [#allocation6], 8192
    $region21: #{lincls_forward.1} parent=1 // pred_fallthru
      _
    %v45 = vld [vmem:[#allocation2] sm:$0xff]
    %v46 = vld [vmem:[#allocation2 + $0x8] sm:$0xff]
    %v47 = vld [vmem:[#allocation2 + $0x10] sm:$0xff]
    %v48 = vld [vmem:[#allocation2 + $0x18] sm:$0xff]
    %v49 = vld [vmem:[#allocation5] sm:$0xff]
    %v50 = vld [vmem:[#allocation5 + $0x8] sm:$0xff]
    %v51 = vld [vmem:[#allocation5 + $0x10] sm:$0xff]
    %v52 = vld [vmem:[#allocation5 + $0x18] sm:$0xff]
    %v53 = vld [vmem:[#allocation5 + $0x20] sm:$0xff]
    %v54 = vld [vmem:[#allocation5 + $0x28] sm:$0xff]
    %v55 = vld [vmem:[#allocation5 + $0x30] sm:$0xff]
    %v56 = vld [vmem:[#allocation5 + $0x38] sm:$0xff]
    %v57 = vld [vmem:[#allocation5 + $0x40] sm:$0xff]
    %v58 = vld [vmem:[#allocation5 + $0x48] sm:$0xff]
    %v59 = vld [vmem:[#allocation5 + $0x50] sm:$0xff]
    %v60 = vld [vmem:[#allocation5 + $0x58] sm:$0xff]
    %v61 = vld [vmem:[#allocation5 + $0x60] sm:$0xff]
    %v62 = vld [vmem:[#allocation5 + $0x68] sm:$0xff]
    %v63 = vld [vmem:[#allocation5 + $0x70] sm:$0xff]
    %v64 = vld [vmem:[#allocation5 + $0x78] sm:$0xff]
    %v65 = vld [vmem:[#allocation5 + $0x80] sm:$0xff]
    %v66 = vld [vmem:[#allocation5 + $0x88] sm:$0xff]
    %v67 = vld [vmem:[#allocation5 + $0x90] sm:$0xff]
    %v68 = vld [vmem:[#allocation5 + $0x98] sm:$0xff]
    %v69 = vld [vmem:[#allocation5 + $0xa0] sm:$0xff]
    %v70 = vld [vmem:[#allocation5 + $0xa8] sm:$0xff]
    %v71 = vld [vmem:[#allocation5 + $0xb0] sm:$0xff]
    %v72 = vld [vmem:[#allocation5 + $0xb8] sm:$0xff]
    %v73 = vld [vmem:[#allocation5 + $0xc0] sm:$0xff]
    %v74 = vld [vmem:[#allocation5 + $0xc8] sm:$0xff]
    %v75 = vld [vmem:[#allocation5 + $0xd0] sm:$0xff]
    %v76 = vld [vmem:[#allocation5 + $0xd8] sm:$0xff]
    %v77 = vld [vmem:[#allocation5 + $0xe0] sm:$0xff]
    %v78 = vld [vmem:[#allocation5 + $0xe8] sm:$0xff]
    %v79 = vld [vmem:[#allocation5 + $0xf0] sm:$0xff]
    %v80 = vld [vmem:[#allocation5 + $0xf8] sm:$0xff]
    %v81 = vld [vmem:[#allocation5 + $0x100] sm:$0xff]
    %v82 = vld [vmem:[#allocation5 + $0x108] sm:$0xff]
    %v83 = vld [vmem:[#allocation5 + $0x110] sm:$0xff]
    %v84 = vld [vmem:[#allocation5 + $0x118] sm:$0xff]
    %v85 = vld [vmem:[#allocation5 + $0x120] sm:$0xff]
    %v86 = vld [vmem:[#allocation5 + $0x128] sm:$0xff]
    %v87 = vld [vmem:[#allocation5 + $0x130] sm:$0xff]
    %v88 = vld [vmem:[#allocation5 + $0x138] sm:$0xff]
    %v89 = vld [vmem:[#allocation5 + $0x140] sm:$0xff]
    %v90 = vld [vmem:[#allocation5 + $0x148] sm:$0xff]
    %v91 = vld [vmem:[#allocation5 + $0x150] sm:$0xff]
    %v92 = vld [vmem:[#allocation5 + $0x158] sm:$0xff]
    %v93 = vld [vmem:[#allocation5 + $0x160] sm:$0xff]
    %v94 = vld [vmem:[#allocation5 + $0x168] sm:$0xff]
    %v95 = vld [vmem:[#allocation5 + $0x170] sm:$0xff]
    %v96 = vld [vmem:[#allocation5 + $0x178] sm:$0xff]
    %v97 = vld [vmem:[#allocation5 + $0x180] sm:$0xff]
    %v98 = vld [vmem:[#allocation5 + $0x188] sm:$0xff]
    %v99 = vld [vmem:[#allocation5 + $0x190] sm:$0xff]
    %v100 = vld [vmem:[#allocation5 + $0x198] sm:$0xff]
    %v101 = vld [vmem:[#allocation5 + $0x1a0] sm:$0xff]
    %v102 = vld [vmem:[#allocation5 + $0x1a8] sm:$0xff]
    %v103 = vld [vmem:[#allocation5 + $0x1b0] sm:$0xff]
    %v104 = vld [vmem:[#allocation5 + $0x1b8] sm:$0xff]
    %v105 = vld [vmem:[#allocation5 + $0x1c0] sm:$0xff]
    %v106 = vld [vmem:[#allocation5 + $0x1c8] sm:$0xff]
    %v107 = vld [vmem:[#allocation5 + $0x1d0] sm:$0xff]
    %v108 = vld [vmem:[#allocation5 + $0x1d8] sm:$0xff]
    %v109 = vld [vmem:[#allocation5 + $0x1e0] sm:$0xff]
    %v110 = vld [vmem:[#allocation5 + $0x1e8] sm:$0xff]
    %v111 = vld [vmem:[#allocation5 + $0x1f0] sm:$0xff]
    %v112 = vld [vmem:[#allocation5 + $0x1f8] sm:$0xff]
    %v113 = vld [vmem:[%s2] sm:$0x1]
    %v115 = vperm.slane %v113, 0
    %117 = vmatpush.xpose.msra.mxu0 %v109
    %118 = vmatpush.xpose.msra.mxu0 %v105
    %119 = vmatpush.xpose.msra.mxu0 %v101
    %120 = vmatpush.xpose.msra.mxu0 %v97
    %121 = vmatpush.xpose.msra.mxu0 %v93
    %122 = vmatpush.xpose.msra.mxu0 %v89
    %123 = vmatpush.xpose.msra.mxu0 %v85
    %124 = vmatpush.xpose.msra.mxu0 %v81
    %125 = vmatpush.xpose.msra.mxu0 %v77
    %126 = vmatpush.xpose.msra.mxu0 %v73
    %127 = vmatpush.xpose.msra.mxu0 %v69
    %128 = vmatpush.xpose.msra.mxu0 %v65
    %129 = vmatpush.xpose.msra.mxu0 %v61
    %130 = vmatpush.xpose.msra.mxu0 %v57
    %131 = vmatpush.xpose.msra.mxu0 %v53
    %132 = vmatpush.xpose.msra.mxu0 %v49
    %133 = vmatmul.f32.gmra.mxu0 %v45
    %v134 = vpop.f32.mrf.mxu0
    %v135 = vadd.f32 %v115, %v134
    %136 = vdwg.mxu0
    %137 = vmatpush.xpose.msra.mxu0 %v110
    %138 = vmatpush.xpose.msra.mxu0 %v106
    %139 = vmatpush.xpose.msra.mxu0 %v102
    %140 = vmatpush.xpose.msra.mxu0 %v98
    %141 = vmatpush.xpose.msra.mxu0 %v94
    %142 = vmatpush.xpose.msra.mxu0 %v90
    %143 = vmatpush.xpose.msra.mxu0 %v86
    %144 = vmatpush.xpose.msra.mxu0 %v82
    %145 = vmatpush.xpose.msra.mxu0 %v78
    %146 = vmatpush.xpose.msra.mxu0 %v74
    %147 = vmatpush.xpose.msra.mxu0 %v70
    %148 = vmatpush.xpose.msra.mxu0 %v66
    %149 = vmatpush.xpose.msra.mxu0 %v62
    %150 = vmatpush.xpose.msra.mxu0 %v58
    %151 = vmatpush.xpose.msra.mxu0 %v54
    %152 = vmatpush.xpose.msra.mxu0 %v50
    %153 = vmatmul.f32.gmra.mxu0 %v46
    %v154 = vpop.f32.mrf.mxu0
    %v155 = vadd.f32 %v135, %v154
    %156 = vdwg.mxu0
    %157 = vmatpush.xpose.msra.mxu0 %v111
    %158 = vmatpush.xpose.msra.mxu0 %v107
    %159 = vmatpush.xpose.msra.mxu0 %v103
    %160 = vmatpush.xpose.msra.mxu0 %v99
    %161 = vmatpush.xpose.msra.mxu0 %v95
    %162 = vmatpush.xpose.msra.mxu0 %v91
    %163 = vmatpush.xpose.msra.mxu0 %v87
    %164 = vmatpush.xpose.msra.mxu0 %v83
    %165 = vmatpush.xpose.msra.mxu0 %v79
    %166 = vmatpush.xpose.msra.mxu0 %v75
    %167 = vmatpush.xpose.msra.mxu0 %v71
    %168 = vmatpush.xpose.msra.mxu0 %v67
    %169 = vmatpush.xpose.msra.mxu0 %v63
    %170 = vmatpush.xpose.msra.mxu0 %v59
    %171 = vmatpush.xpose.msra.mxu0 %v55
    %172 = vmatpush.xpose.msra.mxu0 %v51
    %173 = vmatmul.f32.gmra.mxu0 %v47
    %v174 = vpop.f32.mrf.mxu0
    %v175 = vadd.f32 %v155, %v174
    %176 = vdwg.mxu0
    %177 = vmatpush.xpose.msra.mxu0 %v112
    %178 = vmatpush.xpose.msra.mxu0 %v108
    %179 = vmatpush.xpose.msra.mxu0 %v104
    %180 = vmatpush.xpose.msra.mxu0 %v100
    %181 = vmatpush.xpose.msra.mxu0 %v96
    %182 = vmatpush.xpose.msra.mxu0 %v92
    %183 = vmatpush.xpose.msra.mxu0 %v88
    %184 = vmatpush.xpose.msra.mxu0 %v84
    %185 = vmatpush.xpose.msra.mxu0 %v80
    %186 = vmatpush.xpose.msra.mxu0 %v76
    %187 = vmatpush.xpose.msra.mxu0 %v72
    %188 = vmatpush.xpose.msra.mxu0 %v68
    %189 = vmatpush.xpose.msra.mxu0 %v64
    %190 = vmatpush.xpose.msra.mxu0 %v60
    %191 = vmatpush.xpose.msra.mxu0 %v56
    %192 = vmatpush.xpose.msra.mxu0 %v52
    %193 = vmatmul.f32.gmra.mxu0 %v48
    %v194 = vpop.f32.mrf.mxu0
    %v195 = vadd.f32 %v175, %v194
    %196 = vdwg.mxu0
    %197 = vst [vmem:[#allocation7] sm:$0xff] %v195
    // Predicated region
    $region22: #{lincls_forward.1} parent=1 // pred_check
      _
    $region23: #{lincls_forward.1} parent=1 // pred_check_branch
      %199 = sbr.rel (0) target = $region25
    $region24: #{lincls_forward.1} parent=1 // pred_region
      %201 = vsyncadd [#allocation4], 0
      %s203 = sshll.u32 [#allocation7], 4
      %s204 = int_to_ptr.vmem [resolvable:$true] %s203
      %s205 = sshll.u32 %s3, 4
      %s206 = int_to_ptr.hbm [resolvable:$true] %s205
      %208 = dma.vmem_to_hbm [thread:$0]  %s204, 128, %s206, [#allocation4]
    $region25: #{lincls_forward.1} parent=1 // pred_fallthru
      _
    // Predicated region
    $region26: #{lincls_forward.1} parent=1 // pred_check
      _
    $region27: #{lincls_forward.1} parent=1 // pred_check_branch
      %210 = sbr.rel (0) target = $region29
    $region28: #{lincls_forward.1} parent=1 // pred_region
      %212 = dma.done [#allocation4], 128
    $region29: #{lincls_forward.1} parent=1 // pred_fallthru
      _
    %213 = vsyncpa [#allocation3], 1
    %214 = vsyncpa [#allocation6], 1
    %215 = vsyncpa [#allocation4], 1

</llo_original>
